<compile_context>
chip_gen: v7x
topology: tpu7x:2x2x1
jax: 0.10.0
libtpu: 0.0.40
codegen_flags: <defaults>
</compile_context>

<pallas_src>
import math
import functools

import jax
import jax.numpy as jnp
from jax import lax
from jax.experimental import pallas as pl
from jax.experimental.pallas import tpu as pltpu


def _round_up(x, m):
    return ((x + m - 1) // m) * m


# -----------------------------------------------------------------------------
# Kernel
# -----------------------------------------------------------------------------
def _fused_mlp_kernel(x_ref, w0_ref, b0_ref, wh_ref, bh_ref, wl_ref, bl_ref,
                      o_ref, *, in_features, num_hidden, small_in, last_relu):
    """x_ref:(tm,in_pad)  w0_ref:(in_pad,Fh) f32  b0_ref:(1,Fh) f32
    wh_ref:(n_stack,Fh,Fh) bf16  bh_ref:(n_stack,1,Fh) f32
    wl_ref:(Fh,Fo) bf16  bl_ref:(1,Fo) f32  o_ref:(tm,Fo)

    Whole MLP per row-tile; activations stay in VMEM/vregs, f32 accumulation,
    single cast at the end."""
    f32 = jnp.float32
    bf16 = jnp.bfloat16

    # ---- layer 0 (in_features -> hidden), always followed by ReLU ----------
    if small_in:
        # Tiny contraction dim (SIREN coords): a few VPU broadcast-MACs beat a
        # nearly-empty MXU pass and need no K padding at all.
        x = x_ref[...].astype(f32)                      # (tm, in_f)
        w0 = w0_ref[...].astype(f32)                    # (in_f, Fh)
        h = x[:, 0:1] * w0[0:1, :]
        for k in range(1, in_features):
            h = h + x[:, k:k + 1] * w0[k:k + 1, :]
        h = h + b0_ref[...]
    else:
        h = jnp.dot(x_ref[...].astype(bf16), w0_ref[...].astype(bf16),
                    preferred_element_type=f32) + b0_ref[...]
    h = jnp.maximum(h, 0.0)

    # ---- hidden layers (hidden -> hidden), ReLU each ------------------------
    if num_hidden <= 8:
        for li in range(num_hidden):
            h = jnp.dot(h.astype(bf16), wh_ref[li],
                        preferred_element_type=f32) + bh_ref[li]
            h = jnp.maximum(h, 0.0)
    else:
        # Deep nets: dynamic-indexed loop bounds live ranges / avoids big unroll.
        def body(li, hc):
            hn = jnp.dot(hc.astype(bf16), wh_ref[li],
                         preferred_element_type=f32) + bh_ref[li]
            return jnp.maximum(hn, 0.0)
        h = lax.fori_loop(0, num_hidden, body, h)

    # ---- last layer (hidden -> out), ReLU iff not outermost_linear ----------
    h = jnp.dot(h.astype(bf16), wl_ref[...],
                preferred_element_type=f32) + bl_ref[...]
    if last_relu:
        h = jnp.maximum(h, 0.0)

    o_ref[...] = h.astype(o_ref.dtype)


# -----------------------------------------------------------------------------
# Parameter init (matches FCBlock(nonlinearity='relu'))
# -----------------------------------------------------------------------------
def init_fcblock_params(key, in_features, out_features, num_hidden_layers,
                        hidden_features):
    """weights: kaiming_normal_(fan_in, relu) -> std = sqrt(2/fan_in)
    biases : nn.Linear default -> U(-1/sqrt(fan_in), 1/sqrt(fan_in))
    Weights stored PyTorch-style as (out_features, in_features)."""
    dims = ([in_features] + [hidden_features] * (num_hidden_layers + 1)
            + [out_features])
    params = []
    for i in range(len(dims) - 1):
        fan_in, fan_out = dims[i], dims[i + 1]
        key, kw, kb = jax.random.split(key, 3)
        std = math.sqrt(2.0 / fan_in)
        w = std * jax.random.normal(kw, (fan_out, fan_in), dtype=jnp.float32)
        bound = 1.0 / math.sqrt(fan_in)
        b = jax.random.uniform(kb, (fan_out,), dtype=jnp.float32,
                               minval=-bound, maxval=bound)
        params.append((w, b))
    return params


# -----------------------------------------------------------------------------
# One-time packing (hoisted out of the forward pass)
# -----------------------------------------------------------------------------
def prepare_fcblock_params(params, in_features):
    """Pad / transpose / cast the layer parameters once.  Returns (packed, meta)."""
    n_layers = len(params)
    num_hidden = n_layers - 2
    hidden = params[0][0].shape[0]
    out_f = params[-1][0].shape[0]

    Fh = _round_up(hidden, 128)           # hidden lane width
    Fo = _round_up(out_f, 128)            # output gets its own lane width
    small_in = in_features <= 16
    in_pad = in_features if small_in else _round_up(in_features, 16)

    # layer 0 (kept f32: tiny, and used on the VPU for small in_features)
    w0_t, b0_v = params[0]
    w0 = jnp.zeros((in_pad, Fh), jnp.float32)
    w0 = w0.at[:in_features, :hidden].set(w0_t.T.astype(jnp.float32))
    b0 = jnp.zeros((1, Fh), jnp.float32).at[0, :hidden].set(b0_v)

    # hidden layers, stacked, bf16 for the MXU
    n_stack = max(num_hidden, 1)
    wh = jnp.zeros((n_stack, Fh, Fh), jnp.bfloat16)
    bh = jnp.zeros((n_stack, 1, Fh), jnp.float32)
    for li in range(num_hidden):
        w, b = params[1 + li]
        wh = wh.at[li, :hidden, :hidden].set(w.T.astype(jnp.bfloat16))
        bh = bh.at[li, 0, :hidden].set(b)

    # last layer, bf16
    wl_t, bl_v = params[-1]
    wl = jnp.zeros((Fh, Fo), jnp.bfloat16)
    wl = wl.at[:hidden, :out_f].set(wl_t.T.astype(jnp.bfloat16))
    bl = jnp.zeros((1, Fo), jnp.float32).at[0, :out_f].set(bl_v)

    packed = dict(w0=w0, b0=b0, wh=wh, bh=bh, wl=wl, bl=bl)
    meta = dict(in_features=in_features, in_pad=in_pad, hidden=hidden,
                out_features=out_f, num_hidden=num_hidden, n_stack=n_stack,
                Fh=Fh, Fo=Fo, small_in=small_in,
                true_dims=[in_features] + [hidden] * (num_hidden + 1) + [out_f])
    return packed, meta


# -----------------------------------------------------------------------------
# Forward
# -----------------------------------------------------------------------------
def fcblock_forward(coords, packed, meta, outermost_linear=False, tm=512):
    """coords: (..., in_features) -> (..., out_features). Single fused kernel."""
    lead_shape = coords.shape[:-1]
    in_f = meta["in_features"]
    out_f = meta["out_features"]
    in_pad, Fh, Fo = meta["in_pad"], meta["Fh"], meta["Fo"]
    n_stack, num_hidden = meta["n_stack"], meta["num_hidden"]

    x = coords.reshape(-1, in_f)
    M = x.shape[0]

    # Row tile: large for throughput, but ensure >=2 grid steps when possible so
    # v7x's two TensorCores both get work; 16-row multiple (bf16-friendly).
    tm = max(16, min(tm, _round_up(pl.cdiv(M, 2), 16)))
    Mp = pl.cdiv(M, tm) * tm
    grid = (Mp // tm,)

    # Row padding only (no feature padding of the input when small_in).
    if Mp != M or in_pad != in_f:
        x_p = jnp.zeros((Mp, in_pad), x.dtype).at[:M, :in_f].set(x)
    else:
        x_p = x

    kernel = functools.partial(
        _fused_mlp_kernel,
        in_features=in_f, num_hidden=num_hidden,
        small_in=meta["small_in"], last_relu=not outermost_linear)

    w0, b0, wh, bh, wl, bl = (packed[k] for k in ("w0", "b0", "wh", "bh", "wl", "bl"))

    # VMEM budget: single-buffered resident weights + double-buffered row tiles
    # + in-kernel f32/bf16 activation tiles, with headroom below the chip cap.
    weight_bytes = sum(int(a.size) * a.dtype.itemsize
                       for a in (w0, b0, wh, bh, wl, bl))
    act_bytes = (2 * tm * in_pad * 4        # input tile, double-buffered
                 + 2 * tm * Fo * 4          # output tile, double-buffered
                 + 4 * tm * Fh * 4)         # in-kernel activation slack
    try:
        vmem_cap = int(pltpu.get_tpu_info().vmem_capacity_bytes)
    except Exception:
        vmem_cap = 64 * 1024 * 1024
    vmem_limit = int(min(max(2 * (weight_bytes + act_bytes), 8 * 1024 * 1024),
                         int(0.85 * vmem_cap)))

    # Advisory cost estimate (true, unpadded math / traffic).
    dims = meta["true_dims"]
    flops = 2 * M * sum(dims[i] * dims[i + 1] for i in range(len(dims) - 1))
    bytes_accessed = M * (in_f + out_f) * 4 + weight_bytes
    cost = pl.CostEstimate(flops=flops, transcendentals=0,
                           bytes_accessed=bytes_accessed)

    def run(weight_mode):
        def wspec(shape):
            idx = lambda i, _n=len(shape): (0,) * _n
            if weight_mode is None:
                return pl.BlockSpec(shape, idx)
            return pl.BlockSpec(shape, idx, pipeline_mode=weight_mode)

        return pl.pallas_call(
            kernel,
            out_shape=jax.ShapeDtypeStruct((Mp, Fo), x.dtype),
            grid_spec=pltpu.PrefetchScalarGridSpec(
                num_scalar_prefetch=0,
                grid=grid,
                in_specs=[
                    pl.BlockSpec((tm, in_pad), lambda i: (i, 0)),
                    wspec((in_pad, Fh)),
                    wspec((1, Fh)),
                    wspec((n_stack, Fh, Fh)),
                    wspec((n_stack, 1, Fh)),
                    wspec((Fh, Fo)),
                    wspec((1, Fo)),
                ],
                out_specs=pl.BlockSpec((tm, Fo), lambda i: (i, 0)),
            ),
            compiler_params=pltpu.CompilerParams(
                dimension_semantics=("parallel",),
                vmem_limit_bytes=vmem_limit,
            ),
            cost_estimate=cost,
        )(x_p, w0, b0, wh, bh, wl, bl)

    try:
        # Constant index maps -> fetched once; single-buffer to halve weight VMEM.
        out_p = run(pl.Buffered(buffer_count=1))
    except Exception:
        # Fallback for environments where pipeline_mode isn't supported.
        out_p = run(None)

    y = out_p[:M, :out_f]
    return y.reshape(*lead_shape, out_f)


# -----------------------------------------------------------------------------
# Demo / self-check
# -----------------------------------------------------------------------------
if __name__ == "__main__":
    # Small shapes consistent with the module's forward:
    # coords: (batch=2, seq=8, in_features=4); hidden=32; 2 hidden layers; out=4.
    in_features = 4
    out_features = 4
    hidden_features = 32
    num_hidden_layers = 2

    key = jax.random.PRNGKey(0)
    key, kx = jax.random.split(key)
    coords = jax.random.normal(kx, (2, 8, in_features), dtype=jnp.float32)

    params = init_fcblock_params(key, in_features, out_features,
                                 num_hidden_layers, hidden_features)
    packed, meta = prepare_fcblock_params(params, in_features)

    out = fcblock_forward(coords, packed, meta, outermost_linear=False)
    out = jax.block_until_ready(out)
    assert out.shape == (2, 8, out_features)

    # Reference mirroring the kernel arithmetic: f32 first layer, bf16 matmul
    # operands afterwards with f32 accumulation, ReLU after every layer
    # (outermost_linear=False).
    x_ref = coords.reshape(-1, in_features)
    for li, (w, b) in enumerate(params):
        if li == 0:
            y = x_ref @ w.T
        else:
            y = jnp.dot(x_ref.astype(jnp.bfloat16), w.T.astype(jnp.bfloat16),
                        preferred_element_type=jnp.float32)
        x_ref = jnp.maximum(y + b, 0.0)
    ref = x_ref.reshape(2, 8, out_features)

    max_err = float(jnp.max(jnp.abs(out - ref)))
    assert jnp.allclose(out, ref, atol=1e-2, rtol=1e-2), max_err

    print("KERNEL_OK")
</pallas_src>

<mosaic_0001>
module attributes {stable_mosaic.version = 11 : i64} {
  func.func @_fused_mlp_kernel(%arg0: i32, %arg1: memref<16x4xf32, #tpu.memory_space<vmem>>, %arg2: memref<4x128xf32, #tpu.memory_space<vmem>>, %arg3: memref<1x128xf32, #tpu.memory_space<vmem>>, %arg4: memref<2x128x128xbf16, #tpu.memory_space<vmem>>, %arg5: memref<2x1x128xf32, #tpu.memory_space<vmem>>, %arg6: memref<128x128xbf16, #tpu.memory_space<vmem>>, %arg7: memref<1x128xf32, #tpu.memory_space<vmem>>, %arg8: memref<16x128xf32, #tpu.memory_space<vmem>>) attributes {dimension_semantics = [#tpu.dimension_semantics<parallel>], iteration_bounds = array<i64: 1>, scalar_prefetch = 0 : i64, scratch_operands = 0 : i64, tpu.core_type = #tpu.core_type<tc>, window_params = [{transform_indices = @transform_0, window_bounds = array<i64: 16, 4>}, {pipeline_mode = #tpu.pipeline_mode<synchronous>, transform_indices = @transform_1, window_bounds = array<i64: 4, 128>}, {pipeline_mode = #tpu.pipeline_mode<synchronous>, transform_indices = @transform_2, window_bounds = array<i64: 1, 128>}, {pipeline_mode = #tpu.pipeline_mode<synchronous>, transform_indices = @transform_3, window_bounds = array<i64: 2, 128, 128>}, {pipeline_mode = #tpu.pipeline_mode<synchronous>, transform_indices = @transform_4, window_bounds = array<i64: 2, 1, 128>}, {pipeline_mode = #tpu.pipeline_mode<synchronous>, transform_indices = @transform_5, window_bounds = array<i64: 128, 128>}, {pipeline_mode = #tpu.pipeline_mode<synchronous>, transform_indices = @transform_6, window_bounds = array<i64: 1, 128>}, {transform_indices = @transform_7, window_bounds = array<i64: 16, 128>}]} {
    %c0 = arith.constant 0 : index
    %c0_0 = arith.constant 0 : index
    %0 = vector.load %arg1[%c0, %c0_0] : memref<16x4xf32, #tpu.memory_space<vmem>>, vector<16x4xf32>
    %c0_1 = arith.constant 0 : index
    %c0_2 = arith.constant 0 : index
    %1 = vector.load %arg2[%c0_1, %c0_2] : memref<4x128xf32, #tpu.memory_space<vmem>>, vector<4x128xf32>
    %2 = vector.extract_strided_slice %0 {offsets = [0, 0], sizes = [16, 1], strides = [1, 1]} : vector<16x4xf32> to vector<16x1xf32>
    %3 = vector.extract_strided_slice %1 {offsets = [0, 0], sizes = [1, 128], strides = [1, 1]} : vector<4x128xf32> to vector<1x128xf32>
    %4 = vector.broadcast %2 : vector<16x1xf32> to vector<16x128xf32>
    %5 = vector.broadcast %3 : vector<1x128xf32> to vector<16x128xf32>
    %6 = arith.mulf %4, %5 : vector<16x128xf32>
    %7 = vector.extract_strided_slice %0 {offsets = [0, 1], sizes = [16, 1], strides = [1, 1]} : vector<16x4xf32> to vector<16x1xf32>
    %8 = vector.extract_strided_slice %1 {offsets = [1, 0], sizes = [1, 128], strides = [1, 1]} : vector<4x128xf32> to vector<1x128xf32>
    %9 = vector.broadcast %7 : vector<16x1xf32> to vector<16x128xf32>
    %10 = vector.broadcast %8 : vector<1x128xf32> to vector<16x128xf32>
    %11 = arith.mulf %9, %10 : vector<16x128xf32>
    %12 = arith.addf %6, %11 : vector<16x128xf32>
    %13 = vector.extract_strided_slice %0 {offsets = [0, 2], sizes = [16, 1], strides = [1, 1]} : vector<16x4xf32> to vector<16x1xf32>
    %14 = vector.extract_strided_slice %1 {offsets = [2, 0], sizes = [1, 128], strides = [1, 1]} : vector<4x128xf32> to vector<1x128xf32>
    %15 = vector.broadcast %13 : vector<16x1xf32> to vector<16x128xf32>
    %16 = vector.broadcast %14 : vector<1x128xf32> to vector<16x128xf32>
    %17 = arith.mulf %15, %16 : vector<16x128xf32>
    %18 = arith.addf %12, %17 : vector<16x128xf32>
    %19 = vector.extract_strided_slice %0 {offsets = [0, 3], sizes = [16, 1], strides = [1, 1]} : vector<16x4xf32> to vector<16x1xf32>
    %20 = vector.extract_strided_slice %1 {offsets = [3, 0], sizes = [1, 128], strides = [1, 1]} : vector<4x128xf32> to vector<1x128xf32>
    %21 = vector.broadcast %19 : vector<16x1xf32> to vector<16x128xf32>
    %22 = vector.broadcast %20 : vector<1x128xf32> to vector<16x128xf32>
    %23 = arith.mulf %21, %22 : vector<16x128xf32>
    %24 = arith.addf %18, %23 : vector<16x128xf32>
    %c0_3 = arith.constant 0 : index
    %c0_4 = arith.constant 0 : index
    %25 = vector.load %arg3[%c0_3, %c0_4] : memref<1x128xf32, #tpu.memory_space<vmem>>, vector<1x128xf32>
    %26 = vector.broadcast %25 : vector<1x128xf32> to vector<16x128xf32>
    %27 = arith.addf %24, %26 : vector<16x128xf32>
    %cst = arith.constant 0.000000e+00 : f32
    %28 = vector.broadcast %cst : f32 to vector<16x128xf32>
    %29 = arith.maximumf %27, %28 : vector<16x128xf32>
    %30 = arith.truncf %29 : vector<16x128xf32> to vector<16x128xbf16>
    %c0_5 = arith.constant 0 : index
    %c0_6 = arith.constant 0 : index
    %c0_7 = arith.constant 0 : index
    %31 = vector.load %arg4[%c0_5, %c0_6, %c0_7] : memref<2x128x128xbf16, #tpu.memory_space<vmem>>, vector<1x128x128xbf16>
    %32 = vector.shape_cast %31 : vector<1x128x128xbf16> to vector<128x128xbf16>
    %cst_8 = arith.constant dense<0.000000e+00> : vector<16x128xf32>
    %33 = tpu.matmul %30, %32, %cst_8 {dimension_numbers = #tpu.dot_dimension_numbers<[1], [0], [0], [1], [0, 0, 1, 1], [], []>} : vector<16x128xbf16>, vector<128x128xbf16>, vector<16x128xf32> -> vector<16x128xf32>
    %c0_9 = arith.constant 0 : index
    %c0_10 = arith.constant 0 : index
    %c0_11 = arith.constant 0 : index
    %34 = vector.load %arg5[%c0_9, %c0_10, %c0_11] : memref<2x1x128xf32, #tpu.memory_space<vmem>>, vector<1x1x128xf32>
    %35 = vector.shape_cast %34 : vector<1x1x128xf32> to vector<1x128xf32>
    %36 = vector.broadcast %35 : vector<1x128xf32> to vector<16x128xf32>
    %37 = arith.addf %33, %36 : vector<16x128xf32>
    %cst_12 = arith.constant 0.000000e+00 : f32
    %38 = vector.broadcast %cst_12 : f32 to vector<16x128xf32>
    %39 = arith.maximumf %37, %38 : vector<16x128xf32>
    %40 = arith.truncf %39 : vector<16x128xf32> to vector<16x128xbf16>
    %c1 = arith.constant 1 : index
    %c0_13 = arith.constant 0 : index
    %c0_14 = arith.constant 0 : index
    %41 = vector.load %arg4[%c1, %c0_13, %c0_14] : memref<2x128x128xbf16, #tpu.memory_space<vmem>>, vector<1x128x128xbf16>
    %42 = vector.shape_cast %41 : vector<1x128x128xbf16> to vector<128x128xbf16>
    %cst_15 = arith.constant dense<0.000000e+00> : vector<16x128xf32>
    %43 = tpu.matmul %40, %42, %cst_15 {dimension_numbers = #tpu.dot_dimension_numbers<[1], [0], [0], [1], [0, 0, 1, 1], [], []>} : vector<16x128xbf16>, vector<128x128xbf16>, vector<16x128xf32> -> vector<16x128xf32>
    %c1_16 = arith.constant 1 : index
    %c0_17 = arith.constant 0 : index
    %c0_18 = arith.constant 0 : index
    %44 = vector.load %arg5[%c1_16, %c0_17, %c0_18] : memref<2x1x128xf32, #tpu.memory_space<vmem>>, vector<1x1x128xf32>
    %45 = vector.shape_cast %44 : vector<1x1x128xf32> to vector<1x128xf32>
    %46 = vector.broadcast %45 : vector<1x128xf32> to vector<16x128xf32>
    %47 = arith.addf %43, %46 : vector<16x128xf32>
    %cst_19 = arith.constant 0.000000e+00 : f32
    %48 = vector.broadcast %cst_19 : f32 to vector<16x128xf32>
    %49 = arith.maximumf %47, %48 : vector<16x128xf32>
    %50 = arith.truncf %49 : vector<16x128xf32> to vector<16x128xbf16>
    %c0_20 = arith.constant 0 : index
    %c0_21 = arith.constant 0 : index
    %51 = vector.load %arg6[%c0_20, %c0_21] : memref<128x128xbf16, #tpu.memory_space<vmem>>, vector<128x128xbf16>
    %cst_22 = arith.constant dense<0.000000e+00> : vector<16x128xf32>
    %52 = tpu.matmul %50, %51, %cst_22 {dimension_numbers = #tpu.dot_dimension_numbers<[1], [0], [0], [1], [0, 0, 1, 1], [], []>} : vector<16x128xbf16>, vector<128x128xbf16>, vector<16x128xf32> -> vector<16x128xf32>
    %c0_23 = arith.constant 0 : index
    %c0_24 = arith.constant 0 : index
    %53 = vector.load %arg7[%c0_23, %c0_24] : memref<1x128xf32, #tpu.memory_space<vmem>>, vector<1x128xf32>
    %54 = vector.broadcast %53 : vector<1x128xf32> to vector<16x128xf32>
    %55 = arith.addf %52, %54 : vector<16x128xf32>
    %cst_25 = arith.constant 0.000000e+00 : f32
    %56 = vector.broadcast %cst_25 : f32 to vector<16x128xf32>
    %57 = arith.maximumf %55, %56 : vector<16x128xf32>
    %c0_26 = arith.constant 0 : index
    %c0_27 = arith.constant 0 : index
    %58 = vector.load %arg8[%c0_26, %c0_27] : memref<16x128xf32, #tpu.memory_space<vmem>>, vector<16x128xf32>
    tpu.vector_store %arg8[%c0_26, %c0_27], %57 {strides = array<i32>} : memref<16x128xf32, #tpu.memory_space<vmem>>, vector<16x128xf32>,
    return
  }
  func.func @transform_0(%arg0: i32) -> (i32, i32) {
    %c0_i32 = arith.constant 0 : i32
    %c0_i32_0 = arith.constant 0 : i32
    return %arg0, %c0_i32 : i32, i32
  }
  func.func @transform_1(%arg0: i32) -> (i32, i32) {
    %c0_i32 = arith.constant 0 : i32
    %c0_i32_0 = arith.constant 0 : i32
    %c0_i32_1 = arith.constant 0 : i32
    return %c0_i32, %c0_i32_0 : i32, i32
  }
  func.func @transform_2(%arg0: i32) -> (i32, i32) {
    %c0_i32 = arith.constant 0 : i32
    %c0_i32_0 = arith.constant 0 : i32
    %c0_i32_1 = arith.constant 0 : i32
    return %c0_i32, %c0_i32_0 : i32, i32
  }
  func.func @transform_3(%arg0: i32) -> (i32, i32, i32) {
    %c0_i32 = arith.constant 0 : i32
    %c0_i32_0 = arith.constant 0 : i32
    %c0_i32_1 = arith.constant 0 : i32
    %c0_i32_2 = arith.constant 0 : i32
    return %c0_i32, %c0_i32_0, %c0_i32_1 : i32, i32, i32
  }
  func.func @transform_4(%arg0: i32) -> (i32, i32, i32) {
    %c0_i32 = arith.constant 0 : i32
    %c0_i32_0 = arith.constant 0 : i32
    %c0_i32_1 = arith.constant 0 : i32
    %c0_i32_2 = arith.constant 0 : i32
    return %c0_i32, %c0_i32_0, %c0_i32_1 : i32, i32, i32
  }
  func.func @transform_5(%arg0: i32) -> (i32, i32) {
    %c0_i32 = arith.constant 0 : i32
    %c0_i32_0 = arith.constant 0 : i32
    %c0_i32_1 = arith.constant 0 : i32
    return %c0_i32, %c0_i32_0 : i32, i32
  }
  func.func @transform_6(%arg0: i32) -> (i32, i32) {
    %c0_i32 = arith.constant 0 : i32
    %c0_i32_0 = arith.constant 0 : i32
    %c0_i32_1 = arith.constant 0 : i32
    return %c0_i32, %c0_i32_0 : i32, i32
  }
  func.func @transform_7(%arg0: i32) -> (i32, i32) {
    %c0_i32 = arith.constant 0 : i32
    %c0_i32_0 = arith.constant 0 : i32
    return %arg0, %c0_i32 : i32, i32
  }
}

module attributes {stable_mosaic.version = 11 : i64} {
  func.func @_fused_mlp_kernel(%arg0: i32, %arg1: memref<16x4xf32, #tpu.memory_space<vmem>>, %arg2: memref<4x128xf32, #tpu.memory_space<vmem>>, %arg3: memref<1x128xf32, #tpu.memory_space<vmem>>, %arg4: memref<2x128x128xbf16, #tpu.memory_space<vmem>>, %arg5: memref<2x1x128xf32, #tpu.memory_space<vmem>>, %arg6: memref<128x128xbf16, #tpu.memory_space<vmem>>, %arg7: memref<1x128xf32, #tpu.memory_space<vmem>>, %arg8: memref<16x128xf32, #tpu.memory_space<vmem>>) attributes {dimension_semantics = [#tpu.dimension_semantics<parallel>], iteration_bounds = array<i64: 1>, scalar_prefetch = 0 : i64, scratch_operands = 0 : i64, tpu.core_type = #tpu.core_type<tc>, window_params = [{transform_indices = @transform_0, window_bounds = array<i64: 16, 4>}, {pipeline_mode = #tpu.pipeline_mode<synchronous>, transform_indices = @transform_1, window_bounds = array<i64: 4, 128>}, {pipeline_mode = #tpu.pipeline_mode<synchronous>, transform_indices = @transform_2, window_bounds = array<i64: 1, 128>}, {pipeline_mode = #tpu.pipeline_mode<synchronous>, transform_indices = @transform_3, window_bounds = array<i64: 2, 128, 128>}, {pipeline_mode = #tpu.pipeline_mode<synchronous>, transform_indices = @transform_4, window_bounds = array<i64: 2, 1, 128>}, {pipeline_mode = #tpu.pipeline_mode<synchronous>, transform_indices = @transform_5, window_bounds = array<i64: 128, 128>}, {pipeline_mode = #tpu.pipeline_mode<synchronous>, transform_indices = @transform_6, window_bounds = array<i64: 1, 128>}, {transform_indices = @transform_7, window_bounds = array<i64: 16, 128>}]} {
    %c0 = arith.constant 0 : index
    %c0_0 = arith.constant 0 : index
    %0 = vector.load %arg1[%c0, %c0_0] : memref<16x4xf32, #tpu.memory_space<vmem>>, vector<16x4xf32>
    %c0_1 = arith.constant 0 : index
    %c0_2 = arith.constant 0 : index
    %1 = vector.load %arg2[%c0_1, %c0_2] : memref<4x128xf32, #tpu.memory_space<vmem>>, vector<4x128xf32>
    %2 = vector.extract_strided_slice %0 {offsets = [0, 0], sizes = [16, 1], strides = [1, 1]} : vector<16x4xf32> to vector<16x1xf32>
    %3 = vector.extract_strided_slice %1 {offsets = [0, 0], sizes = [1, 128], strides = [1, 1]} : vector<4x128xf32> to vector<1x128xf32>
    %4 = vector.broadcast %2 : vector<16x1xf32> to vector<16x128xf32>
    %5 = vector.broadcast %3 : vector<1x128xf32> to vector<16x128xf32>
    %6 = arith.mulf %4, %5 : vector<16x128xf32>
    %7 = vector.extract_strided_slice %0 {offsets = [0, 1], sizes = [16, 1], strides = [1, 1]} : vector<16x4xf32> to vector<16x1xf32>
    %8 = vector.extract_strided_slice %1 {offsets = [1, 0], sizes = [1, 128], strides = [1, 1]} : vector<4x128xf32> to vector<1x128xf32>
    %9 = vector.broadcast %7 : vector<16x1xf32> to vector<16x128xf32>
    %10 = vector.broadcast %8 : vector<1x128xf32> to vector<16x128xf32>
    %11 = arith.mulf %9, %10 : vector<16x128xf32>
    %12 = arith.addf %6, %11 : vector<16x128xf32>
    %13 = vector.extract_strided_slice %0 {offsets = [0, 2], sizes = [16, 1], strides = [1, 1]} : vector<16x4xf32> to vector<16x1xf32>
    %14 = vector.extract_strided_slice %1 {offsets = [2, 0], sizes = [1, 128], strides = [1, 1]} : vector<4x128xf32> to vector<1x128xf32>
    %15 = vector.broadcast %13 : vector<16x1xf32> to vector<16x128xf32>
    %16 = vector.broadcast %14 : vector<1x128xf32> to vector<16x128xf32>
    %17 = arith.mulf %15, %16 : vector<16x128xf32>
    %18 = arith.addf %12, %17 : vector<16x128xf32>
    %19 = vector.extract_strided_slice %0 {offsets = [0, 3], sizes = [16, 1], strides = [1, 1]} : vector<16x4xf32> to vector<16x1xf32>
    %20 = vector.extract_strided_slice %1 {offsets = [3, 0], sizes = [1, 128], strides = [1, 1]} : vector<4x128xf32> to vector<1x128xf32>
    %21 = vector.broadcast %19 : vector<16x1xf32> to vector<16x128xf32>
    %22 = vector.broadcast %20 : vector<1x128xf32> to vector<16x128xf32>
    %23 = arith.mulf %21, %22 : vector<16x128xf32>
    %24 = arith.addf %18, %23 : vector<16x128xf32>
    %c0_3 = arith.constant 0 : index
    %c0_4 = arith.constant 0 : index
    %25 = vector.load %arg3[%c0_3, %c0_4] : memref<1x128xf32, #tpu.memory_space<vmem>>, vector<1x128xf32>
    %26 = vector.broadcast %25 : vector<1x128xf32> to vector<16x128xf32>
    %27 = arith.addf %24, %26 : vector<16x128xf32>
    %cst = arith.constant 0.000000e+00 : f32
    %28 = vector.broadcast %cst : f32 to vector<16x128xf32>
    %29 = arith.maximumf %27, %28 : vector<16x128xf32>
    %30 = arith.truncf %29 : vector<16x128xf32> to vector<16x128xbf16>
    %c0_5 = arith.constant 0 : index
    %c0_6 = arith.constant 0 : index
    %c0_7 = arith.constant 0 : index
    %31 = vector.load %arg4[%c0_5, %c0_6, %c0_7] : memref<2x128x128xbf16, #tpu.memory_space<vmem>>, vector<1x128x128xbf16>
    %32 = vector.shape_cast %31 : vector<1x128x128xbf16> to vector<128x128xbf16>
    %cst_8 = arith.constant dense<0.000000e+00> : vector<16x128xf32>
    %33 = tpu.matmul %30, %32, %cst_8 {dimension_numbers = #tpu.dot_dimension_numbers<[1], [0], [0], [1], [0, 0, 1, 1], [], []>} : vector<16x128xbf16>, vector<128x128xbf16>, vector<16x128xf32> -> vector<16x128xf32>
    %c0_9 = arith.constant 0 : index
    %c0_10 = arith.constant 0 : index
    %c0_11 = arith.constant 0 : index
    %34 = vector.load %arg5[%c0_9, %c0_10, %c0_11] : memref<2x1x128xf32, #tpu.memory_space<vmem>>, vector<1x1x128xf32>
    %35 = vector.shape_cast %34 : vector<1x1x128xf32> to vector<1x128xf32>
    %36 = vector.broadcast %35 : vector<1x128xf32> to vector<16x128xf32>
    %37 = arith.addf %33, %36 : vector<16x128xf32>
    %cst_12 = arith.constant 0.000000e+00 : f32
    %38 = vector.broadcast %cst_12 : f32 to vector<16x128xf32>
    %39 = arith.maximumf %37, %38 : vector<16x128xf32>
    %40 = arith.truncf %39 : vector<16x128xf32> to vector<16x128xbf16>
    %c1 = arith.constant 1 : index
    %c0_13 = arith.constant 0 : index
    %c0_14 = arith.constant 0 : index
    %41 = vector.load %arg4[%c1, %c0_13, %c0_14] : memref<2x128x128xbf16, #tpu.memory_space<vmem>>, vector<1x128x128xbf16>
    %42 = vector.shape_cast %41 : vector<1x128x128xbf16> to vector<128x128xbf16>
    %cst_15 = arith.constant dense<0.000000e+00> : vector<16x128xf32>
    %43 = tpu.matmul %40, %42, %cst_15 {dimension_numbers = #tpu.dot_dimension_numbers<[1], [0], [0], [1], [0, 0, 1, 1], [], []>} : vector<16x128xbf16>, vector<128x128xbf16>, vector<16x128xf32> -> vector<16x128xf32>
    %c1_16 = arith.constant 1 : index
    %c0_17 = arith.constant 0 : index
    %c0_18 = arith.constant 0 : index
    %44 = vector.load %arg5[%c1_16, %c0_17, %c0_18] : memref<2x1x128xf32, #tpu.memory_space<vmem>>, vector<1x1x128xf32>
    %45 = vector.shape_cast %44 : vector<1x1x128xf32> to vector<1x128xf32>
    %46 = vector.broadcast %45 : vector<1x128xf32> to vector<16x128xf32>
    %47 = arith.addf %43, %46 : vector<16x128xf32>
    %cst_19 = arith.constant 0.000000e+00 : f32
    %48 = vector.broadcast %cst_19 : f32 to vector<16x128xf32>
    %49 = arith.maximumf %47, %48 : vector<16x128xf32>
    %50 = arith.truncf %49 : vector<16x128xf32> to vector<16x128xbf16>
    %c0_20 = arith.constant 0 : index
    %c0_21 = arith.constant 0 : index
    %51 = vector.load %arg6[%c0_20, %c0_21] : memref<128x128xbf16, #tpu.memory_space<vmem>>, vector<128x128xbf16>
    %cst_22 = arith.constant dense<0.000000e+00> : vector<16x128xf32>
    %52 = tpu.matmul %50, %51, %cst_22 {dimension_numbers = #tpu.dot_dimension_numbers<[1], [0], [0], [1], [0, 0, 1, 1], [], []>} : vector<16x128xbf16>, vector<128x128xbf16>, vector<16x128xf32> -> vector<16x128xf32>
    %c0_23 = arith.constant 0 : index
    %c0_24 = arith.constant 0 : index
    %53 = vector.load %arg7[%c0_23, %c0_24] : memref<1x128xf32, #tpu.memory_space<vmem>>, vector<1x128xf32>
    %54 = vector.broadcast %53 : vector<1x128xf32> to vector<16x128xf32>
    %55 = arith.addf %52, %54 : vector<16x128xf32>
    %cst_25 = arith.constant 0.000000e+00 : f32
    %56 = vector.broadcast %cst_25 : f32 to vector<16x128xf32>
    %57 = arith.maximumf %55, %56 : vector<16x128xf32>
    %c0_26 = arith.constant 0 : index
    %c0_27 = arith.constant 0 : index
    %58 = vector.load %arg8[%c0_26, %c0_27] : memref<16x128xf32, #tpu.memory_space<vmem>>, vector<16x128xf32>
    tpu.vector_store %arg8[%c0_26, %c0_27], %57 {strides = array<i32>} : memref<16x128xf32, #tpu.memory_space<vmem>>, vector<16x128xf32>,
    return
  }
  func.func @transform_0(%arg0: i32) -> (i32, i32) {
    %c0_i32 = arith.constant 0 : i32
    %c0_i32_0 = arith.constant 0 : i32
    return %arg0, %c0_i32 : i32, i32
  }
  func.func @transform_1(%arg0: i32) -> (i32, i32) {
    %c0_i32 = arith.constant 0 : i32
    %c0_i32_0 = arith.constant 0 : i32
    %c0_i32_1 = arith.constant 0 : i32
    return %c0_i32, %c0_i32_0 : i32, i32
  }
  func.func @transform_2(%arg0: i32) -> (i32, i32) {
    %c0_i32 = arith.constant 0 : i32
    %c0_i32_0 = arith.constant 0 : i32
    %c0_i32_1 = arith.constant 0 : i32
    return %c0_i32, %c0_i32_0 : i32, i32
  }
  func.func @transform_3(%arg0: i32) -> (i32, i32, i32) {
    %c0_i32 = arith.constant 0 : i32
    %c0_i32_0 = arith.constant 0 : i32
    %c0_i32_1 = arith.constant 0 : i32
    %c0_i32_2 = arith.constant 0 : i32
    return %c0_i32, %c0_i32_0, %c0_i32_1 : i32, i32, i32
  }
  func.func @transform_4(%arg0: i32) -> (i32, i32, i32) {
    %c0_i32 = arith.constant 0 : i32
    %c0_i32_0 = arith.constant 0 : i32
    %c0_i32_1 = arith.constant 0 : i32
    %c0_i32_2 = arith.constant 0 : i32
    return %c0_i32, %c0_i32_0, %c0_i32_1 : i32, i32, i32
  }
  func.func @transform_5(%arg0: i32) -> (i32, i32) {
    %c0_i32 = arith.constant 0 : i32
    %c0_i32_0 = arith.constant 0 : i32
    %c0_i32_1 = arith.constant 0 : i32
    return %c0_i32, %c0_i32_0 : i32, i32
  }
  func.func @transform_6(%arg0: i32) -> (i32, i32) {
    %c0_i32 = arith.constant 0 : i32
    %c0_i32_0 = arith.constant 0 : i32
    %c0_i32_1 = arith.constant 0 : i32
    return %c0_i32, %c0_i32_0 : i32, i32
  }
  func.func @transform_7(%arg0: i32) -> (i32, i32) {
    %c0_i32 = arith.constant 0 : i32
    %c0_i32_0 = arith.constant 0 : i32
    return %arg0, %c0_i32 : i32, i32
  }
}

</mosaic_0001>

<llo_original>
// kernel: tpu_custom_call.1
$region0: #{tpu_custom_call.1}
  #allocation0 [shape = 'u32[]', space=smem, size = 0x4, offset = 0x4, fixed_abs, tag = 'smem constant byte address 0x4 - core index']
  #allocation1 [shape = 'u32[144,128]{1,0:T(1,128)}', space=vmem, size = 0x12000, scoped, tag = 'internal scratch']
  %s0 = inlined_call_operand.vmem [shape: f32[16,4], index: 0, kind: input, shape index: {}]
  %s1 = inlined_call_operand.vmem [shape: f32[4,128], index: 1, kind: input, shape index: {}]
  %s2 = inlined_call_operand.vmem [shape: f32[1,128], index: 2, kind: input, shape index: {}]
  %s3 = inlined_call_operand.hbm [shape: bf16[2,128,128], index: 3, kind: input, shape index: {}]
  %s4 = inlined_call_operand.vmem [shape: f32[2,1,128], index: 4, kind: input, shape index: {}]
  %s5 = inlined_call_operand.hbm [shape: bf16[128,128], index: 5, kind: input, shape index: {}]
  %s6 = inlined_call_operand.vmem [shape: f32[1,128], index: 6, kind: input, shape index: {}]
  %s7 = inlined_call_operand.hbm [shape: f32[16,128], index: 7, kind: output, shape index: {}]
  %s8 = sld [smem:[#allocation0]]
  $region46: #{tpu_custom_call.1} parent=0
    _
  %s10 = ssub.s32 1, %s8
  %s11 = scalar_select 0, %s10, %s8
  $region1: #{tpu_custom_call.1} parent=0
    #allocation2 [shape = 'u8[65536]{0}', space=vmem, size = 0x10000, scoped, tag = 'input window, operand 3, single buffered']
    #allocation3 [shape = 's32[1]{0}', space=sflag, size = 0x4, scoped, tag = 'scoped memory for tpu_custom_call.1']
    #allocation4 [shape = 's32[1]{0}', space=sflag, size = 0x4, scoped, tag = 'scoped memory for tpu_custom_call.1']
    #allocation5 [shape = 'u8[32768]{0}', space=vmem, size = 0x8000, scoped, tag = 'input window, operand 5, single buffered']
    #allocation6 [shape = 's32[1]{0}', space=sflag, size = 0x4, scoped, tag = 'scoped memory for tpu_custom_call.1']
    #allocation7 [shape = 'u8[8192]{0}', space=vmem, size = 0x2000, scoped, tag = 'output window, operand 0, single buffered']
    %12 = vsyncpa [#allocation3], 0
    %13 = vsyncpa [#allocation6], 0
    %14 = vsyncpa [#allocation4], 0
    // Predicated region
    $region2: #{tpu_custom_call.1} parent=1 // pred_check
      _
    $region3: #{tpu_custom_call.1} parent=1 // pred_check_branch
      %16 = sbr.rel (0) target = $region5
    $region4: #{tpu_custom_call.1} parent=1 // pred_region
      _
    $region5: #{tpu_custom_call.1} parent=1 // pred_fallthru
      _
    // Predicated region
    $region6: #{tpu_custom_call.1} parent=1 // pred_check
      _
    $region7: #{tpu_custom_call.1} parent=1 // pred_check_branch
      %18 = sbr.rel (0) target = $region9
    $region8: #{tpu_custom_call.1} parent=1 // pred_region
      _
    $region9: #{tpu_custom_call.1} parent=1 // pred_fallthru
      _
    // Predicated region
    $region10: #{tpu_custom_call.1} parent=1 // pred_check
      _
    $region11: #{tpu_custom_call.1} parent=1 // pred_check_branch
      %20 = sbr.rel (0) target = $region13
    $region12: #{tpu_custom_call.1} parent=1 // pred_region
      _
    $region13: #{tpu_custom_call.1} parent=1 // pred_fallthru
      _
    // Predicated region
    $region14: #{tpu_custom_call.1} parent=1 // pred_check
      _
    $region15: #{tpu_custom_call.1} parent=1 // pred_check_branch
      %22 = sbr.rel (0) target = $region17
    $region16: #{tpu_custom_call.1} parent=1 // pred_region
      %s24 = ssub.s32 2048, 2048
      %25 = vsyncadd [#allocation3], %s24
      %s26 = sshll.u32 [#allocation2], 4
      %s27 = int_to_ptr.vmem [resolvable:$true] %s26
      %32 = dma.hbm_to_vmem [thread:$0]  %s3, 2048, %s27, [#allocation3], 64, 64, 4
    $region17: #{tpu_custom_call.1} parent=1 // pred_fallthru
      _
    // Predicated region
    $region18: #{tpu_custom_call.1} parent=1 // pred_check
      _
    $region19: #{tpu_custom_call.1} parent=1 // pred_check_branch
      %34 = sbr.rel (0) target = $region21
    $region20: #{tpu_custom_call.1} parent=1 // pred_region
      _
    $region21: #{tpu_custom_call.1} parent=1 // pred_fallthru
      _
    // Predicated region
    $region22: #{tpu_custom_call.1} parent=1 // pred_check
      _
    $region23: #{tpu_custom_call.1} parent=1 // pred_check_branch
      %36 = sbr.rel (0) target = $region25
    $region24: #{tpu_custom_call.1} parent=1 // pred_region
      %s38 = ssub.s32 1024, 1024
      %39 = vsyncadd [#allocation6], %s38
      %s40 = sshll.u32 [#allocation5], 4
      %s41 = int_to_ptr.vmem [resolvable:$true] %s40
      %46 = dma.hbm_to_vmem [thread:$0]  %s5, 1024, %s41, [#allocation6], 64, 64, 4
    $region25: #{tpu_custom_call.1} parent=1 // pred_fallthru
      _
    // Predicated region
    $region26: #{tpu_custom_call.1} parent=1 // pred_check
      _
    $region27: #{tpu_custom_call.1} parent=1 // pred_check_branch
      %48 = sbr.rel (0) target = $region29
    $region28: #{tpu_custom_call.1} parent=1 // pred_region
      _
    $region29: #{tpu_custom_call.1} parent=1 // pred_fallthru
      _
    // Predicated region
    $region30: #{tpu_custom_call.1} parent=1 // pred_check
      _
    $region31: #{tpu_custom_call.1} parent=1 // pred_check_branch
      %50 = sbr.rel (0) target = $region33
    $region32: #{tpu_custom_call.1} parent=1 // pred_region
      %51 = dma.done [#allocation3], 2048
    $region33: #{tpu_custom_call.1} parent=1 // pred_fallthru
      _
    // Predicated region
    $region34: #{tpu_custom_call.1} parent=1 // pred_check
      _
    $region35: #{tpu_custom_call.1} parent=1 // pred_check_branch
      %53 = sbr.rel (0) target = $region37
    $region36: #{tpu_custom_call.1} parent=1 // pred_region
      %54 = dma.done [#allocation6], 1024
    $region37: #{tpu_custom_call.1} parent=1 // pred_fallthru
      _
    %v56 = vld [vmem:[%s0] sm:$0xff]
    %v57 = vld [vmem:[%s0 + $0x8] sm:$0xff]
    %v58 = vld [vmem:[%s1] sm:$0xf]
    %60 = vset.pattern.permute.xlu0 0
    %61 = vperm.xlu0 %60, %v56
    %v62 = vpop.permute.xlu0 %61
    %65 = vset.pattern.permute.xlu0 0
    %66 = vperm.xlu0 %65, %v57
    %v67 = vpop.permute.xlu0 %66
    %v69 = vlaneseq
    %v70 = vshrl.u32 %v69, 7
    %v71 = vsub.s32 0, %v70
    %v72 = vrot.slane %v58, %v71
    %v73 = vmul.f32 %v62, %v72
    %v74 = vmul.f32 %v67, %v72
    %75 = vset.pattern.permute.xlu0 1
    %76 = vperm.xlu0 %75, %v56
    %v77 = vpop.permute.xlu0 %76
    %79 = vset.pattern.permute.xlu0 1
    %80 = vperm.xlu0 %79, %v57
    %v81 = vpop.permute.xlu0 %80
    %v83 = vlaneseq
    %v84 = vshrl.u32 %v83, 7
    %v85 = vsub.s32 1, %v84
    %v86 = vrot.slane %v58, %v85
    %v87 = vmul.f32 %v77, %v86
    %v88 = vmul.f32 %v81, %v86
    %v89 = vadd.f32 %v73, %v87
    %v90 = vadd.f32 %v74, %v88
    %91 = vset.pattern.permute.xlu0 2
    %92 = vperm.xlu0 %91, %v56
    %v93 = vpop.permute.xlu0 %92
    %95 = vset.pattern.permute.xlu0 2
    %96 = vperm.xlu0 %95, %v57
    %v97 = vpop.permute.xlu0 %96
    %v99 = vlaneseq
    %v100 = vshrl.u32 %v99, 7
    %v101 = vsub.s32 2, %v100
    %v102 = vrot.slane %v58, %v101
    %v103 = vmul.f32 %v93, %v102
    %v104 = vmul.f32 %v97, %v102
    %v105 = vadd.f32 %v89, %v103
    %v106 = vadd.f32 %v90, %v104
    %107 = vset.pattern.permute.xlu0 3
    %108 = vperm.xlu0 %107, %v56
    %v109 = vpop.permute.xlu0 %108
    %111 = vset.pattern.permute.xlu0 3
    %112 = vperm.xlu0 %111, %v57
    %v113 = vpop.permute.xlu0 %112
    %v115 = vlaneseq
    %v116 = vshrl.u32 %v115, 7
    %v117 = vsub.s32 3, %v116
    %v118 = vrot.slane %v58, %v117
    %v119 = vmul.f32 %v109, %v118
    %v120 = vmul.f32 %v113, %v118
    %v121 = vadd.f32 %v105, %v119
    %v122 = vadd.f32 %v106, %v120
    %v123 = vld [vmem:[%s2] sm:$0x1]
    %v125 = vlaneseq
    %v126 = vshrl.u32 %v125, 7
    %v127 = vsub.s32 0, %v126
    %v128 = vrot.slane %v123, %v127
    %v130 = vadd.f32 %v121, %v128
    %v131 = vadd.f32 %v122, %v128
    %v132 = vmax.f32 %v130, 0.0
    %v133 = vmax.f32 %v131, 0.0
    %v134 = vpack.c.bf16 %v133, %v132
    %v135 = vld [vmem:[#allocation2] sm:$0xf]
    %v136 = vld [vmem:[#allocation2 + $0x4] sm:$0xf]
    %v137 = vld [vmem:[#allocation2 + $0x8] sm:$0xf]
    %v138 = vld [vmem:[#allocation2 + $0xc] sm:$0xf]
    %v139 = vld [vmem:[#allocation2 + $0x10] sm:$0xf]
    %v140 = vld [vmem:[#allocation2 + $0x14] sm:$0xf]
    %v141 = vld [vmem:[#allocation2 + $0x18] sm:$0xf]
    %v142 = vld [vmem:[#allocation2 + $0x1c] sm:$0xf]
    %v143 = vld [vmem:[#allocation2 + $0x20] sm:$0xf]
    %v144 = vld [vmem:[#allocation2 + $0x24] sm:$0xf]
    %v145 = vld [vmem:[#allocation2 + $0x28] sm:$0xf]
    %v146 = vld [vmem:[#allocation2 + $0x2c] sm:$0xf]
    %v147 = vld [vmem:[#allocation2 + $0x30] sm:$0xf]
    %v148 = vld [vmem:[#allocation2 + $0x34] sm:$0xf]
    %v149 = vld [vmem:[#allocation2 + $0x38] sm:$0xf]
    %v150 = vld [vmem:[#allocation2 + $0x3c] sm:$0xf]
    %v151 = vld [vmem:[%s4] sm:$0x1]
    %v153 = vlaneseq
    %v154 = vshrl.u32 %v153, 7
    %v155 = vsub.s32 0, %v154
    %v156 = vrot.slane %v151, %v155
    %v174 = vunpack.c.l.b16 %v135
    %v175 = vunpack.c.l.b16 %v136
    %v176 = vunpack.c.l.b16 %v137
    %v177 = vunpack.c.l.b16 %v138
    %v178 = vunpack.c.l.b16 %v139
    %v179 = vunpack.c.l.b16 %v140
    %v180 = vunpack.c.l.b16 %v141
    %v181 = vunpack.c.l.b16 %v142
    %v182 = vunpack.c.l.b16 %v143
    %v183 = vunpack.c.l.b16 %v144
    %v184 = vunpack.c.l.b16 %v145
    %v185 = vunpack.c.l.b16 %v146
    %v186 = vunpack.c.l.b16 %v147
    %v187 = vunpack.c.l.b16 %v148
    %v188 = vunpack.c.l.b16 %v149
    %v189 = vunpack.c.l.b16 %v150
    %v190 = vpack.c.b16 %v175, %v174
    %v191 = vpack.c.b16 %v177, %v176
    %v192 = vpack.c.b16 %v179, %v178
    %v193 = vpack.c.b16 %v181, %v180
    %v194 = vpack.c.b16 %v183, %v182
    %v195 = vpack.c.b16 %v185, %v184
    %v196 = vpack.c.b16 %v187, %v186
    %v197 = vpack.c.b16 %v189, %v188
    %206 = vmatprep.subr.bf16.mxu0 0
    %207 = vmatpush1.bf16.msra.mxu0 %v190
    %208 = vmatprep.subr.bf16.mxu0 0
    %209 = vmatpush1.bf16.msra.mxu0 %v191
    %210 = vmatprep.subr.bf16.mxu0 0
    %211 = vmatpush1.bf16.msra.mxu0 %v192
    %212 = vmatprep.subr.bf16.mxu0 0
    %213 = vmatpush1.bf16.msra.mxu0 %v193
    %214 = vmatprep.subr.bf16.mxu0 0
    %215 = vmatpush1.bf16.msra.mxu0 %v194
    %216 = vmatprep.subr.bf16.mxu0 0
    %217 = vmatpush1.bf16.msra.mxu0 %v195
    %218 = vmatprep.subr.bf16.mxu0 0
    %219 = vmatpush1.bf16.msra.mxu0 %v196
    %220 = vmatprep.subr.bf16.mxu0 0
    %221 = vmatpush1.bf16.msra.mxu0 %v197
    %222 = vmatprep.subr.bf16.mxu0 0
    %223 = vmatpush1.bf16.msra.mxu0 0
    %224 = vmatprep.subr.bf16.mxu0 0
    %225 = vmatpush1.bf16.msra.mxu0 0
    %226 = vmatprep.subr.bf16.mxu0 0
    %227 = vmatpush1.bf16.msra.mxu0 0
    %228 = vmatprep.subr.bf16.mxu0 0
    %229 = vmatpush1.bf16.msra.mxu0 0
    %230 = vmatprep.subr.bf16.mxu0 0
    %231 = vmatpush1.bf16.msra.mxu0 0
    %232 = vmatprep.subr.bf16.mxu0 0
    %233 = vmatpush1.bf16.msra.mxu0 0
    %234 = vmatprep.subr.bf16.mxu0 0
    %235 = vmatpush1.bf16.msra.mxu0 0
    %236 = vmatprep.subr.bf16.mxu0 0
    %237 = vmatpush1.bf16.msra.mxu0 0
    %238 = vmatprep.mubr.bf16.mxu0 0
    %239 = vmatmul.mubr.bf16.gmra.mrb[0].mxu0 %v134
    %v240 = vpop.f32.mrb[0].mxu0
    %v241 = vadd.f32 %v156, %v240
    %v242 = vpop.f32.mrb[0].mxu0
    %v243 = vpop.f32.mrb[0].mxu0
    %v244 = vadd.f32 %v156, %v243
    %v245 = vpop.f32.mrb[0].mxu0
    %246 = vdwg.mxu0
    %v247 = vmax.f32 %v241, 0.0
    %v248 = vmax.f32 %v244, 0.0
    %v249 = vpack.c.bf16 %v248, %v247
    %s250 = scalar_lea.vmem [#allocation2], 64
    %v251 = vld [vmem:[%s250] sm:$0xf]
    %v252 = vld [vmem:[%s250 + $0x4] sm:$0xf]
    %v253 = vld [vmem:[%s250 + $0x8] sm:$0xf]
    %v254 = vld [vmem:[%s250 + $0xc] sm:$0xf]
    %v255 = vld [vmem:[%s250 + $0x10] sm:$0xf]
    %v256 = vld [vmem:[%s250 + $0x14] sm:$0xf]
    %v257 = vld [vmem:[%s250 + $0x18] sm:$0xf]
    %v258 = vld [vmem:[%s250 + $0x1c] sm:$0xf]
    %v259 = vld [vmem:[%s250 + $0x20] sm:$0xf]
    %v260 = vld [vmem:[%s250 + $0x24] sm:$0xf]
    %v261 = vld [vmem:[%s250 + $0x28] sm:$0xf]
    %v262 = vld [vmem:[%s250 + $0x2c] sm:$0xf]
    %v263 = vld [vmem:[%s250 + $0x30] sm:$0xf]
    %v264 = vld [vmem:[%s250 + $0x34] sm:$0xf]
    %v265 = vld [vmem:[%s250 + $0x38] sm:$0xf]
    %v266 = vld [vmem:[%s250 + $0x3c] sm:$0xf]
    %s267 = scalar_lea.vmem %s4, 1
    %v268 = vld [vmem:[%s267] sm:$0x1]
    %v270 = vlaneseq
    %v271 = vshrl.u32 %v270, 7
    %v272 = vsub.s32 0, %v271
    %v273 = vrot.slane %v268, %v272
    %v291 = vunpack.c.l.b16 %v251
    %v292 = vunpack.c.l.b16 %v252
    %v293 = vunpack.c.l.b16 %v253
    %v294 = vunpack.c.l.b16 %v254
    %v295 = vunpack.c.l.b16 %v255
    %v296 = vunpack.c.l.b16 %v256
    %v297 = vunpack.c.l.b16 %v257
    %v298 = vunpack.c.l.b16 %v258
    %v299 = vunpack.c.l.b16 %v259
    %v300 = vunpack.c.l.b16 %v260
    %v301 = vunpack.c.l.b16 %v261
    %v302 = vunpack.c.l.b16 %v262
    %v303 = vunpack.c.l.b16 %v263
    %v304 = vunpack.c.l.b16 %v264
    %v305 = vunpack.c.l.b16 %v265
    %v306 = vunpack.c.l.b16 %v266
    %v307 = vpack.c.b16 %v292, %v291
    %v308 = vpack.c.b16 %v294, %v293
    %v309 = vpack.c.b16 %v296, %v295
    %v310 = vpack.c.b16 %v298, %v297
    %v311 = vpack.c.b16 %v300, %v299
    %v312 = vpack.c.b16 %v302, %v301
    %v313 = vpack.c.b16 %v304, %v303
    %v314 = vpack.c.b16 %v306, %v305
    %323 = vmatprep.subr.bf16.mxu0 0
    %324 = vmatpush1.bf16.msra.mxu0 %v307
    %325 = vmatprep.subr.bf16.mxu0 0
    %326 = vmatpush1.bf16.msra.mxu0 %v308
    %327 = vmatprep.subr.bf16.mxu0 0
    %328 = vmatpush1.bf16.msra.mxu0 %v309
    %329 = vmatprep.subr.bf16.mxu0 0
    %330 = vmatpush1.bf16.msra.mxu0 %v310
    %331 = vmatprep.subr.bf16.mxu0 0
    %332 = vmatpush1.bf16.msra.mxu0 %v311
    %333 = vmatprep.subr.bf16.mxu0 0
    %334 = vmatpush1.bf16.msra.mxu0 %v312
    %335 = vmatprep.subr.bf16.mxu0 0
    %336 = vmatpush1.bf16.msra.mxu0 %v313
    %337 = vmatprep.subr.bf16.mxu0 0
    %338 = vmatpush1.bf16.msra.mxu0 %v314
    %339 = vmatprep.subr.bf16.mxu0 0
    %340 = vmatpush1.bf16.msra.mxu0 0
    %341 = vmatprep.subr.bf16.mxu0 0
    %342 = vmatpush1.bf16.msra.mxu0 0
    %343 = vmatprep.subr.bf16.mxu0 0
    %344 = vmatpush1.bf16.msra.mxu0 0
    %345 = vmatprep.subr.bf16.mxu0 0
    %346 = vmatpush1.bf16.msra.mxu0 0
    %347 = vmatprep.subr.bf16.mxu0 0
    %348 = vmatpush1.bf16.msra.mxu0 0
    %349 = vmatprep.subr.bf16.mxu0 0
    %350 = vmatpush1.bf16.msra.mxu0 0
    %351 = vmatprep.subr.bf16.mxu0 0
    %352 = vmatpush1.bf16.msra.mxu0 0
    %353 = vmatprep.subr.bf16.mxu0 0
    %354 = vmatpush1.bf16.msra.mxu0 0
    %355 = vmatprep.mubr.bf16.mxu0 0
    %356 = vmatmul.mubr.bf16.gmra.mrb[0].mxu0 %v249
    %v357 = vpop.f32.mrb[0].mxu0
    %v358 = vadd.f32 %v273, %v357
    %v359 = vpop.f32.mrb[0].mxu0
    %v360 = vpop.f32.mrb[0].mxu0
    %v361 = vadd.f32 %v273, %v360
    %v362 = vpop.f32.mrb[0].mxu0
    %363 = vdwg.mxu0
    %v364 = vmax.f32 %v358, 0.0
    %v365 = vmax.f32 %v361, 0.0
    %v366 = vpack.c.bf16 %v365, %v364
    %v367 = vld [vmem:[#allocation5] sm:$0xf]
    %v368 = vld [vmem:[#allocation5 + $0x4] sm:$0xf]
    %v369 = vld [vmem:[#allocation5 + $0x8] sm:$0xf]
    %v370 = vld [vmem:[#allocation5 + $0xc] sm:$0xf]
    %v371 = vld [vmem:[#allocation5 + $0x10] sm:$0xf]
    %v372 = vld [vmem:[#allocation5 + $0x14] sm:$0xf]
    %v373 = vld [vmem:[#allocation5 + $0x18] sm:$0xf]
    %v374 = vld [vmem:[#allocation5 + $0x1c] sm:$0xf]
    %v375 = vld [vmem:[#allocation5 + $0x20] sm:$0xf]
    %v376 = vld [vmem:[#allocation5 + $0x24] sm:$0xf]
    %v377 = vld [vmem:[#allocation5 + $0x28] sm:$0xf]
    %v378 = vld [vmem:[#allocation5 + $0x2c] sm:$0xf]
    %v379 = vld [vmem:[#allocation5 + $0x30] sm:$0xf]
    %v380 = vld [vmem:[#allocation5 + $0x34] sm:$0xf]
    %v381 = vld [vmem:[#allocation5 + $0x38] sm:$0xf]
    %v382 = vld [vmem:[#allocation5 + $0x3c] sm:$0xf]
    %v383 = vld [vmem:[%s6] sm:$0x1]
    %v385 = vlaneseq
    %v386 = vshrl.u32 %v385, 7
    %v387 = vsub.s32 0, %v386
    %v388 = vrot.slane %v383, %v387
    %v406 = vunpack.c.l.b16 %v367
    %v407 = vunpack.c.l.b16 %v368
    %v408 = vunpack.c.l.b16 %v369
    %v409 = vunpack.c.l.b16 %v370
    %v410 = vunpack.c.l.b16 %v371
    %v411 = vunpack.c.l.b16 %v372
    %v412 = vunpack.c.l.b16 %v373
    %v413 = vunpack.c.l.b16 %v374
    %v414 = vunpack.c.l.b16 %v375
    %v415 = vunpack.c.l.b16 %v376
    %v416 = vunpack.c.l.b16 %v377
    %v417 = vunpack.c.l.b16 %v378
    %v418 = vunpack.c.l.b16 %v379
    %v419 = vunpack.c.l.b16 %v380
    %v420 = vunpack.c.l.b16 %v381
    %v421 = vunpack.c.l.b16 %v382
    %v422 = vpack.c.b16 %v407, %v406
    %v423 = vpack.c.b16 %v409, %v408
    %v424 = vpack.c.b16 %v411, %v410
    %v425 = vpack.c.b16 %v413, %v412
    %v426 = vpack.c.b16 %v415, %v414
    %v427 = vpack.c.b16 %v417, %v416
    %v428 = vpack.c.b16 %v419, %v418
    %v429 = vpack.c.b16 %v421, %v420
    %438 = vmatprep.subr.bf16.mxu0 0
    %439 = vmatpush1.bf16.msra.mxu0 %v422
    %440 = vmatprep.subr.bf16.mxu0 0
    %441 = vmatpush1.bf16.msra.mxu0 %v423
    %442 = vmatprep.subr.bf16.mxu0 0
    %443 = vmatpush1.bf16.msra.mxu0 %v424
    %444 = vmatprep.subr.bf16.mxu0 0
    %445 = vmatpush1.bf16.msra.mxu0 %v425
    %446 = vmatprep.subr.bf16.mxu0 0
    %447 = vmatpush1.bf16.msra.mxu0 %v426
    %448 = vmatprep.subr.bf16.mxu0 0
    %449 = vmatpush1.bf16.msra.mxu0 %v427
    %450 = vmatprep.subr.bf16.mxu0 0
    %451 = vmatpush1.bf16.msra.mxu0 %v428
    %452 = vmatprep.subr.bf16.mxu0 0
    %453 = vmatpush1.bf16.msra.mxu0 %v429
    %454 = vmatprep.subr.bf16.mxu0 0
    %455 = vmatpush1.bf16.msra.mxu0 0
    %456 = vmatprep.subr.bf16.mxu0 0
    %457 = vmatpush1.bf16.msra.mxu0 0
    %458 = vmatprep.subr.bf16.mxu0 0
    %459 = vmatpush1.bf16.msra.mxu0 0
    %460 = vmatprep.subr.bf16.mxu0 0
    %461 = vmatpush1.bf16.msra.mxu0 0
    %462 = vmatprep.subr.bf16.mxu0 0
    %463 = vmatpush1.bf16.msra.mxu0 0
    %464 = vmatprep.subr.bf16.mxu0 0
    %465 = vmatpush1.bf16.msra.mxu0 0
    %466 = vmatprep.subr.bf16.mxu0 0
    %467 = vmatpush1.bf16.msra.mxu0 0
    %468 = vmatprep.subr.bf16.mxu0 0
    %469 = vmatpush1.bf16.msra.mxu0 0
    %470 = vmatprep.mubr.bf16.mxu0 0
    %471 = vmatmul.mubr.bf16.gmra.mrb[0].mxu0 %v366
    %v472 = vpop.f32.mrb[0].mxu0
    %v473 = vadd.f32 %v388, %v472
    %v474 = vpop.f32.mrb[0].mxu0
    %v475 = vpop.f32.mrb[0].mxu0
    %v476 = vadd.f32 %v388, %v475
    %v477 = vpop.f32.mrb[0].mxu0
    %478 = vdwg.mxu0
    %v479 = vmax.f32 %v473, 0.0
    %v480 = vmax.f32 %v476, 0.0
    %481 = vst [vmem:[#allocation7] sm:$0xff] %v479
    %482 = vst [vmem:[#allocation7 + $0x8] sm:$0xff] %v480
    // Predicated region
    $region38: #{tpu_custom_call.1} parent=1 // pred_check
      _
    $region39: #{tpu_custom_call.1} parent=1 // pred_check_branch
      %484 = sbr.rel (0) target = $region41
    $region40: #{tpu_custom_call.1} parent=1 // pred_region
      %s486 = ssub.s32 256, 256
      %487 = vsyncadd [#allocation4], %s486
      %s488 = sshll.u32 [#allocation7], 4
      %s489 = int_to_ptr.vmem [resolvable:$true] %s488
      %494 = dma.vmem_to_hbm [thread:$0]  %s489, 256, %s7, [#allocation4], 128, 128, 8
    $region41: #{tpu_custom_call.1} parent=1 // pred_fallthru
      _
    // Predicated region
    $region42: #{tpu_custom_call.1} parent=1 // pred_check
      _
    $region43: #{tpu_custom_call.1} parent=1 // pred_check_branch
      %496 = sbr.rel (0) target = $region45
    $region44: #{tpu_custom_call.1} parent=1 // pred_region
      %497 = dma.done [#allocation4], 256
    $region45: #{tpu_custom_call.1} parent=1 // pred_fallthru
      _
    %498 = vsyncpa [#allocation3], 1
    %499 = vsyncpa [#allocation6], 1
    %500 = vsyncpa [#allocation4], 1

// kernel: tpu_custom_call.1
$region0: #{tpu_custom_call.1}
  #allocation0 [shape = 'u32[]', space=smem, size = 0x4, offset = 0x4, fixed_abs, tag = 'smem constant byte address 0x4 - core index']
  #allocation1 [shape = 'u32[144,128]{1,0:T(1,128)}', space=vmem, size = 0x12000, scoped, tag = 'internal scratch']
  %s0 = inlined_call_operand.vmem [shape: f32[16,4], index: 0, kind: input, shape index: {}]
  %s1 = inlined_call_operand.vmem [shape: f32[4,128], index: 1, kind: input, shape index: {}]
  %s2 = inlined_call_operand.vmem [shape: f32[1,128], index: 2, kind: input, shape index: {}]
  %s3 = inlined_call_operand.hbm [shape: bf16[2,128,128], index: 3, kind: input, shape index: {}]
  %s4 = inlined_call_operand.vmem [shape: f32[2,1,128], index: 4, kind: input, shape index: {}]
  %s5 = inlined_call_operand.hbm [shape: bf16[128,128], index: 5, kind: input, shape index: {}]
  %s6 = inlined_call_operand.vmem [shape: f32[1,128], index: 6, kind: input, shape index: {}]
  %s7 = inlined_call_operand.hbm [shape: f32[16,128], index: 7, kind: output, shape index: {}]
  %s8 = sld [smem:[#allocation0]]
  $region46: #{tpu_custom_call.1} parent=0
    _
  %s10 = ssub.s32 1, %s8
  %s11 = scalar_select 0, %s10, %s8
  $region1: #{tpu_custom_call.1} parent=0
    #allocation2 [shape = 'u8[65536]{0}', space=vmem, size = 0x10000, scoped, tag = 'input window, operand 3, single buffered']
    #allocation3 [shape = 's32[1]{0}', space=sflag, size = 0x4, scoped, tag = 'scoped memory for tpu_custom_call.1']
    #allocation4 [shape = 's32[1]{0}', space=sflag, size = 0x4, scoped, tag = 'scoped memory for tpu_custom_call.1']
    #allocation5 [shape = 'u8[32768]{0}', space=vmem, size = 0x8000, scoped, tag = 'input window, operand 5, single buffered']
    #allocation6 [shape = 's32[1]{0}', space=sflag, size = 0x4, scoped, tag = 'scoped memory for tpu_custom_call.1']
    #allocation7 [shape = 'u8[8192]{0}', space=vmem, size = 0x2000, scoped, tag = 'output window, operand 0, single buffered']
    %12 = vsyncpa [#allocation3], 0
    %13 = vsyncpa [#allocation6], 0
    %14 = vsyncpa [#allocation4], 0
    // Predicated region
    $region2: #{tpu_custom_call.1} parent=1 // pred_check
      _
    $region3: #{tpu_custom_call.1} parent=1 // pred_check_branch
      %16 = sbr.rel (0) target = $region5
    $region4: #{tpu_custom_call.1} parent=1 // pred_region
      _
    $region5: #{tpu_custom_call.1} parent=1 // pred_fallthru
      _
    // Predicated region
    $region6: #{tpu_custom_call.1} parent=1 // pred_check
      _
    $region7: #{tpu_custom_call.1} parent=1 // pred_check_branch
      %18 = sbr.rel (0) target = $region9
    $region8: #{tpu_custom_call.1} parent=1 // pred_region
      _
    $region9: #{tpu_custom_call.1} parent=1 // pred_fallthru
      _
    // Predicated region
    $region10: #{tpu_custom_call.1} parent=1 // pred_check
      _
    $region11: #{tpu_custom_call.1} parent=1 // pred_check_branch
      %20 = sbr.rel (0) target = $region13
    $region12: #{tpu_custom_call.1} parent=1 // pred_region
      _
    $region13: #{tpu_custom_call.1} parent=1 // pred_fallthru
      _
    // Predicated region
    $region14: #{tpu_custom_call.1} parent=1 // pred_check
      _
    $region15: #{tpu_custom_call.1} parent=1 // pred_check_branch
      %22 = sbr.rel (0) target = $region17
    $region16: #{tpu_custom_call.1} parent=1 // pred_region
      %s24 = ssub.s32 2048, 2048
      %25 = vsyncadd [#allocation3], %s24
      %s26 = sshll.u32 [#allocation2], 4
      %s27 = int_to_ptr.vmem [resolvable:$true] %s26
      %32 = dma.hbm_to_vmem [thread:$0]  %s3, 2048, %s27, [#allocation3], 64, 64, 4
    $region17: #{tpu_custom_call.1} parent=1 // pred_fallthru
      _
    // Predicated region
    $region18: #{tpu_custom_call.1} parent=1 // pred_check
      _
    $region19: #{tpu_custom_call.1} parent=1 // pred_check_branch
      %34 = sbr.rel (0) target = $region21
    $region20: #{tpu_custom_call.1} parent=1 // pred_region
      _
    $region21: #{tpu_custom_call.1} parent=1 // pred_fallthru
      _
    // Predicated region
    $region22: #{tpu_custom_call.1} parent=1 // pred_check
      _
    $region23: #{tpu_custom_call.1} parent=1 // pred_check_branch
      %36 = sbr.rel (0) target = $region25
    $region24: #{tpu_custom_call.1} parent=1 // pred_region
      %s38 = ssub.s32 1024, 1024
      %39 = vsyncadd [#allocation6], %s38
      %s40 = sshll.u32 [#allocation5], 4
      %s41 = int_to_ptr.vmem [resolvable:$true] %s40
      %46 = dma.hbm_to_vmem [thread:$0]  %s5, 1024, %s41, [#allocation6], 64, 64, 4
    $region25: #{tpu_custom_call.1} parent=1 // pred_fallthru
      _
    // Predicated region
    $region26: #{tpu_custom_call.1} parent=1 // pred_check
      _
    $region27: #{tpu_custom_call.1} parent=1 // pred_check_branch
      %48 = sbr.rel (0) target = $region29
    $region28: #{tpu_custom_call.1} parent=1 // pred_region
      _
    $region29: #{tpu_custom_call.1} parent=1 // pred_fallthru
      _
    // Predicated region
    $region30: #{tpu_custom_call.1} parent=1 // pred_check
      _
    $region31: #{tpu_custom_call.1} parent=1 // pred_check_branch
      %50 = sbr.rel (0) target = $region33
    $region32: #{tpu_custom_call.1} parent=1 // pred_region
      %51 = dma.done [#allocation3], 2048
    $region33: #{tpu_custom_call.1} parent=1 // pred_fallthru
      _
    // Predicated region
    $region34: #{tpu_custom_call.1} parent=1 // pred_check
      _
    $region35: #{tpu_custom_call.1} parent=1 // pred_check_branch
      %53 = sbr.rel (0) target = $region37
    $region36: #{tpu_custom_call.1} parent=1 // pred_region
      %54 = dma.done [#allocation6], 1024
    $region37: #{tpu_custom_call.1} parent=1 // pred_fallthru
      _
    %v56 = vld [vmem:[%s0] sm:$0xff]
    %v57 = vld [vmem:[%s0 + $0x8] sm:$0xff]
    %v58 = vld [vmem:[%s1] sm:$0xf]
    %60 = vset.pattern.permute.xlu0 0
    %61 = vperm.xlu0 %60, %v56
    %v62 = vpop.permute.xlu0 %61
    %65 = vset.pattern.permute.xlu0 0
    %66 = vperm.xlu0 %65, %v57
    %v67 = vpop.permute.xlu0 %66
    %v69 = vlaneseq
    %v70 = vshrl.u32 %v69, 7
    %v71 = vsub.s32 0, %v70
    %v72 = vrot.slane %v58, %v71
    %v73 = vmul.f32 %v62, %v72
    %v74 = vmul.f32 %v67, %v72
    %75 = vset.pattern.permute.xlu0 1
    %76 = vperm.xlu0 %75, %v56
    %v77 = vpop.permute.xlu0 %76
    %79 = vset.pattern.permute.xlu0 1
    %80 = vperm.xlu0 %79, %v57
    %v81 = vpop.permute.xlu0 %80
    %v83 = vlaneseq
    %v84 = vshrl.u32 %v83, 7
    %v85 = vsub.s32 1, %v84
    %v86 = vrot.slane %v58, %v85
    %v87 = vmul.f32 %v77, %v86
    %v88 = vmul.f32 %v81, %v86
    %v89 = vadd.f32 %v73, %v87
    %v90 = vadd.f32 %v74, %v88
    %91 = vset.pattern.permute.xlu0 2
    %92 = vperm.xlu0 %91, %v56
    %v93 = vpop.permute.xlu0 %92
    %95 = vset.pattern.permute.xlu0 2
    %96 = vperm.xlu0 %95, %v57
    %v97 = vpop.permute.xlu0 %96
    %v99 = vlaneseq
    %v100 = vshrl.u32 %v99, 7
    %v101 = vsub.s32 2, %v100
    %v102 = vrot.slane %v58, %v101
    %v103 = vmul.f32 %v93, %v102
    %v104 = vmul.f32 %v97, %v102
    %v105 = vadd.f32 %v89, %v103
    %v106 = vadd.f32 %v90, %v104
    %107 = vset.pattern.permute.xlu0 3
    %108 = vperm.xlu0 %107, %v56
    %v109 = vpop.permute.xlu0 %108
    %111 = vset.pattern.permute.xlu0 3
    %112 = vperm.xlu0 %111, %v57
    %v113 = vpop.permute.xlu0 %112
    %v115 = vlaneseq
    %v116 = vshrl.u32 %v115, 7
    %v117 = vsub.s32 3, %v116
    %v118 = vrot.slane %v58, %v117
    %v119 = vmul.f32 %v109, %v118
    %v120 = vmul.f32 %v113, %v118
    %v121 = vadd.f32 %v105, %v119
    %v122 = vadd.f32 %v106, %v120
    %v123 = vld [vmem:[%s2] sm:$0x1]
    %v125 = vlaneseq
    %v126 = vshrl.u32 %v125, 7
    %v127 = vsub.s32 0, %v126
    %v128 = vrot.slane %v123, %v127
    %v130 = vadd.f32 %v121, %v128
    %v131 = vadd.f32 %v122, %v128
    %v132 = vmax.f32 %v130, 0.0
    %v133 = vmax.f32 %v131, 0.0
    %v134 = vpack.c.bf16 %v133, %v132
    %v135 = vld [vmem:[#allocation2] sm:$0xf]
    %v136 = vld [vmem:[#allocation2 + $0x4] sm:$0xf]
    %v137 = vld [vmem:[#allocation2 + $0x8] sm:$0xf]
    %v138 = vld [vmem:[#allocation2 + $0xc] sm:$0xf]
    %v139 = vld [vmem:[#allocation2 + $0x10] sm:$0xf]
    %v140 = vld [vmem:[#allocation2 + $0x14] sm:$0xf]
    %v141 = vld [vmem:[#allocation2 + $0x18] sm:$0xf]
    %v142 = vld [vmem:[#allocation2 + $0x1c] sm:$0xf]
    %v143 = vld [vmem:[#allocation2 + $0x20] sm:$0xf]
    %v144 = vld [vmem:[#allocation2 + $0x24] sm:$0xf]
    %v145 = vld [vmem:[#allocation2 + $0x28] sm:$0xf]
    %v146 = vld [vmem:[#allocation2 + $0x2c] sm:$0xf]
    %v147 = vld [vmem:[#allocation2 + $0x30] sm:$0xf]
    %v148 = vld [vmem:[#allocation2 + $0x34] sm:$0xf]
    %v149 = vld [vmem:[#allocation2 + $0x38] sm:$0xf]
    %v150 = vld [vmem:[#allocation2 + $0x3c] sm:$0xf]
    %v151 = vld [vmem:[%s4] sm:$0x1]
    %v153 = vlaneseq
    %v154 = vshrl.u32 %v153, 7
    %v155 = vsub.s32 0, %v154
    %v156 = vrot.slane %v151, %v155
    %v174 = vunpack.c.l.b16 %v135
    %v175 = vunpack.c.l.b16 %v136
    %v176 = vunpack.c.l.b16 %v137
    %v177 = vunpack.c.l.b16 %v138
    %v178 = vunpack.c.l.b16 %v139
    %v179 = vunpack.c.l.b16 %v140
    %v180 = vunpack.c.l.b16 %v141
    %v181 = vunpack.c.l.b16 %v142
    %v182 = vunpack.c.l.b16 %v143
    %v183 = vunpack.c.l.b16 %v144
    %v184 = vunpack.c.l.b16 %v145
    %v185 = vunpack.c.l.b16 %v146
    %v186 = vunpack.c.l.b16 %v147
    %v187 = vunpack.c.l.b16 %v148
    %v188 = vunpack.c.l.b16 %v149
    %v189 = vunpack.c.l.b16 %v150
    %v190 = vpack.c.b16 %v175, %v174
    %v191 = vpack.c.b16 %v177, %v176
    %v192 = vpack.c.b16 %v179, %v178
    %v193 = vpack.c.b16 %v181, %v180
    %v194 = vpack.c.b16 %v183, %v182
    %v195 = vpack.c.b16 %v185, %v184
    %v196 = vpack.c.b16 %v187, %v186
    %v197 = vpack.c.b16 %v189, %v188
    %206 = vmatprep.subr.bf16.mxu0 0
    %207 = vmatpush1.bf16.msra.mxu0 %v190
    %208 = vmatprep.subr.bf16.mxu0 0
    %209 = vmatpush1.bf16.msra.mxu0 %v191
    %210 = vmatprep.subr.bf16.mxu0 0
    %211 = vmatpush1.bf16.msra.mxu0 %v192
    %212 = vmatprep.subr.bf16.mxu0 0
    %213 = vmatpush1.bf16.msra.mxu0 %v193
    %214 = vmatprep.subr.bf16.mxu0 0
    %215 = vmatpush1.bf16.msra.mxu0 %v194
    %216 = vmatprep.subr.bf16.mxu0 0
    %217 = vmatpush1.bf16.msra.mxu0 %v195
    %218 = vmatprep.subr.bf16.mxu0 0
    %219 = vmatpush1.bf16.msra.mxu0 %v196
    %220 = vmatprep.subr.bf16.mxu0 0
    %221 = vmatpush1.bf16.msra.mxu0 %v197
    %222 = vmatprep.subr.bf16.mxu0 0
    %223 = vmatpush1.bf16.msra.mxu0 0
    %224 = vmatprep.subr.bf16.mxu0 0
    %225 = vmatpush1.bf16.msra.mxu0 0
    %226 = vmatprep.subr.bf16.mxu0 0
    %227 = vmatpush1.bf16.msra.mxu0 0
    %228 = vmatprep.subr.bf16.mxu0 0
    %229 = vmatpush1.bf16.msra.mxu0 0
    %230 = vmatprep.subr.bf16.mxu0 0
    %231 = vmatpush1.bf16.msra.mxu0 0
    %232 = vmatprep.subr.bf16.mxu0 0
    %233 = vmatpush1.bf16.msra.mxu0 0
    %234 = vmatprep.subr.bf16.mxu0 0
    %235 = vmatpush1.bf16.msra.mxu0 0
    %236 = vmatprep.subr.bf16.mxu0 0
    %237 = vmatpush1.bf16.msra.mxu0 0
    %238 = vmatprep.mubr.bf16.mxu0 0
    %239 = vmatmul.mubr.bf16.gmra.mrb[0].mxu0 %v134
    %v240 = vpop.f32.mrb[0].mxu0
    %v241 = vadd.f32 %v156, %v240
    %v242 = vpop.f32.mrb[0].mxu0
    %v243 = vpop.f32.mrb[0].mxu0
    %v244 = vadd.f32 %v156, %v243
    %v245 = vpop.f32.mrb[0].mxu0
    %246 = vdwg.mxu0
    %v247 = vmax.f32 %v241, 0.0
    %v248 = vmax.f32 %v244, 0.0
    %v249 = vpack.c.bf16 %v248, %v247
    %s250 = scalar_lea.vmem [#allocation2], 64
    %v251 = vld [vmem:[%s250] sm:$0xf]
    %v252 = vld [vmem:[%s250 + $0x4] sm:$0xf]
    %v253 = vld [vmem:[%s250 + $0x8] sm:$0xf]
    %v254 = vld [vmem:[%s250 + $0xc] sm:$0xf]
    %v255 = vld [vmem:[%s250 + $0x10] sm:$0xf]
    %v256 = vld [vmem:[%s250 + $0x14] sm:$0xf]
    %v257 = vld [vmem:[%s250 + $0x18] sm:$0xf]
    %v258 = vld [vmem:[%s250 + $0x1c] sm:$0xf]
    %v259 = vld [vmem:[%s250 + $0x20] sm:$0xf]
    %v260 = vld [vmem:[%s250 + $0x24] sm:$0xf]
    %v261 = vld [vmem:[%s250 + $0x28] sm:$0xf]
    %v262 = vld [vmem:[%s250 + $0x2c] sm:$0xf]
    %v263 = vld [vmem:[%s250 + $0x30] sm:$0xf]
    %v264 = vld [vmem:[%s250 + $0x34] sm:$0xf]
    %v265 = vld [vmem:[%s250 + $0x38] sm:$0xf]
    %v266 = vld [vmem:[%s250 + $0x3c] sm:$0xf]
    %s267 = scalar_lea.vmem %s4, 1
    %v268 = vld [vmem:[%s267] sm:$0x1]
    %v270 = vlaneseq
    %v271 = vshrl.u32 %v270, 7
    %v272 = vsub.s32 0, %v271
    %v273 = vrot.slane %v268, %v272
    %v291 = vunpack.c.l.b16 %v251
    %v292 = vunpack.c.l.b16 %v252
    %v293 = vunpack.c.l.b16 %v253
    %v294 = vunpack.c.l.b16 %v254
    %v295 = vunpack.c.l.b16 %v255
    %v296 = vunpack.c.l.b16 %v256
    %v297 = vunpack.c.l.b16 %v257
    %v298 = vunpack.c.l.b16 %v258
    %v299 = vunpack.c.l.b16 %v259
    %v300 = vunpack.c.l.b16 %v260
    %v301 = vunpack.c.l.b16 %v261
    %v302 = vunpack.c.l.b16 %v262
    %v303 = vunpack.c.l.b16 %v263
    %v304 = vunpack.c.l.b16 %v264
    %v305 = vunpack.c.l.b16 %v265
    %v306 = vunpack.c.l.b16 %v266
    %v307 = vpack.c.b16 %v292, %v291
    %v308 = vpack.c.b16 %v294, %v293
    %v309 = vpack.c.b16 %v296, %v295
    %v310 = vpack.c.b16 %v298, %v297
    %v311 = vpack.c.b16 %v300, %v299
    %v312 = vpack.c.b16 %v302, %v301
    %v313 = vpack.c.b16 %v304, %v303
    %v314 = vpack.c.b16 %v306, %v305
    %323 = vmatprep.subr.bf16.mxu0 0
    %324 = vmatpush1.bf16.msra.mxu0 %v307
    %325 = vmatprep.subr.bf16.mxu0 0
    %326 = vmatpush1.bf16.msra.mxu0 %v308
    %327 = vmatprep.subr.bf16.mxu0 0
    %328 = vmatpush1.bf16.msra.mxu0 %v309
    %329 = vmatprep.subr.bf16.mxu0 0
    %330 = vmatpush1.bf16.msra.mxu0 %v310
    %331 = vmatprep.subr.bf16.mxu0 0
    %332 = vmatpush1.bf16.msra.mxu0 %v311
    %333 = vmatprep.subr.bf16.mxu0 0
    %334 = vmatpush1.bf16.msra.mxu0 %v312
    %335 = vmatprep.subr.bf16.mxu0 0
    %336 = vmatpush1.bf16.msra.mxu0 %v313
    %337 = vmatprep.subr.bf16.mxu0 0
    %338 = vmatpush1.bf16.msra.mxu0 %v314
    %339 = vmatprep.subr.bf16.mxu0 0
    %340 = vmatpush1.bf16.msra.mxu0 0
    %341 = vmatprep.subr.bf16.mxu0 0
    %342 = vmatpush1.bf16.msra.mxu0 0
    %343 = vmatprep.subr.bf16.mxu0 0
    %344 = vmatpush1.bf16.msra.mxu0 0
    %345 = vmatprep.subr.bf16.mxu0 0
    %346 = vmatpush1.bf16.msra.mxu0 0
    %347 = vmatprep.subr.bf16.mxu0 0
    %348 = vmatpush1.bf16.msra.mxu0 0
    %349 = vmatprep.subr.bf16.mxu0 0
    %350 = vmatpush1.bf16.msra.mxu0 0
    %351 = vmatprep.subr.bf16.mxu0 0
    %352 = vmatpush1.bf16.msra.mxu0 0
    %353 = vmatprep.subr.bf16.mxu0 0
    %354 = vmatpush1.bf16.msra.mxu0 0
    %355 = vmatprep.mubr.bf16.mxu0 0
    %356 = vmatmul.mubr.bf16.gmra.mrb[0].mxu0 %v249
    %v357 = vpop.f32.mrb[0].mxu0
    %v358 = vadd.f32 %v273, %v357
    %v359 = vpop.f32.mrb[0].mxu0
    %v360 = vpop.f32.mrb[0].mxu0
    %v361 = vadd.f32 %v273, %v360
    %v362 = vpop.f32.mrb[0].mxu0
    %363 = vdwg.mxu0
    %v364 = vmax.f32 %v358, 0.0
    %v365 = vmax.f32 %v361, 0.0
    %v366 = vpack.c.bf16 %v365, %v364
    %v367 = vld [vmem:[#allocation5] sm:$0xf]
    %v368 = vld [vmem:[#allocation5 + $0x4] sm:$0xf]
    %v369 = vld [vmem:[#allocation5 + $0x8] sm:$0xf]
    %v370 = vld [vmem:[#allocation5 + $0xc] sm:$0xf]
    %v371 = vld [vmem:[#allocation5 + $0x10] sm:$0xf]
    %v372 = vld [vmem:[#allocation5 + $0x14] sm:$0xf]
    %v373 = vld [vmem:[#allocation5 + $0x18] sm:$0xf]
    %v374 = vld [vmem:[#allocation5 + $0x1c] sm:$0xf]
    %v375 = vld [vmem:[#allocation5 + $0x20] sm:$0xf]
    %v376 = vld [vmem:[#allocation5 + $0x24] sm:$0xf]
    %v377 = vld [vmem:[#allocation5 + $0x28] sm:$0xf]
    %v378 = vld [vmem:[#allocation5 + $0x2c] sm:$0xf]
    %v379 = vld [vmem:[#allocation5 + $0x30] sm:$0xf]
    %v380 = vld [vmem:[#allocation5 + $0x34] sm:$0xf]
    %v381 = vld [vmem:[#allocation5 + $0x38] sm:$0xf]
    %v382 = vld [vmem:[#allocation5 + $0x3c] sm:$0xf]
    %v383 = vld [vmem:[%s6] sm:$0x1]
    %v385 = vlaneseq
    %v386 = vshrl.u32 %v385, 7
    %v387 = vsub.s32 0, %v386
    %v388 = vrot.slane %v383, %v387
    %v406 = vunpack.c.l.b16 %v367
    %v407 = vunpack.c.l.b16 %v368
    %v408 = vunpack.c.l.b16 %v369
    %v409 = vunpack.c.l.b16 %v370
    %v410 = vunpack.c.l.b16 %v371
    %v411 = vunpack.c.l.b16 %v372
    %v412 = vunpack.c.l.b16 %v373
    %v413 = vunpack.c.l.b16 %v374
    %v414 = vunpack.c.l.b16 %v375
    %v415 = vunpack.c.l.b16 %v376
    %v416 = vunpack.c.l.b16 %v377
    %v417 = vunpack.c.l.b16 %v378
    %v418 = vunpack.c.l.b16 %v379
    %v419 = vunpack.c.l.b16 %v380
    %v420 = vunpack.c.l.b16 %v381
    %v421 = vunpack.c.l.b16 %v382
    %v422 = vpack.c.b16 %v407, %v406
    %v423 = vpack.c.b16 %v409, %v408
    %v424 = vpack.c.b16 %v411, %v410
    %v425 = vpack.c.b16 %v413, %v412
    %v426 = vpack.c.b16 %v415, %v414
    %v427 = vpack.c.b16 %v417, %v416
    %v428 = vpack.c.b16 %v419, %v418
    %v429 = vpack.c.b16 %v421, %v420
    %438 = vmatprep.subr.bf16.mxu0 0
    %439 = vmatpush1.bf16.msra.mxu0 %v422
    %440 = vmatprep.subr.bf16.mxu0 0
    %441 = vmatpush1.bf16.msra.mxu0 %v423
    %442 = vmatprep.subr.bf16.mxu0 0
    %443 = vmatpush1.bf16.msra.mxu0 %v424
    %444 = vmatprep.subr.bf16.mxu0 0
    %445 = vmatpush1.bf16.msra.mxu0 %v425
    %446 = vmatprep.subr.bf16.mxu0 0
    %447 = vmatpush1.bf16.msra.mxu0 %v426
    %448 = vmatprep.subr.bf16.mxu0 0
    %449 = vmatpush1.bf16.msra.mxu0 %v427
    %450 = vmatprep.subr.bf16.mxu0 0
    %451 = vmatpush1.bf16.msra.mxu0 %v428
    %452 = vmatprep.subr.bf16.mxu0 0
    %453 = vmatpush1.bf16.msra.mxu0 %v429
    %454 = vmatprep.subr.bf16.mxu0 0
    %455 = vmatpush1.bf16.msra.mxu0 0
    %456 = vmatprep.subr.bf16.mxu0 0
    %457 = vmatpush1.bf16.msra.mxu0 0
    %458 = vmatprep.subr.bf16.mxu0 0
    %459 = vmatpush1.bf16.msra.mxu0 0
    %460 = vmatprep.subr.bf16.mxu0 0
    %461 = vmatpush1.bf16.msra.mxu0 0
    %462 = vmatprep.subr.bf16.mxu0 0
    %463 = vmatpush1.bf16.msra.mxu0 0
    %464 = vmatprep.subr.bf16.mxu0 0
    %465 = vmatpush1.bf16.msra.mxu0 0
    %466 = vmatprep.subr.bf16.mxu0 0
    %467 = vmatpush1.bf16.msra.mxu0 0
    %468 = vmatprep.subr.bf16.mxu0 0
    %469 = vmatpush1.bf16.msra.mxu0 0
    %470 = vmatprep.mubr.bf16.mxu0 0
    %471 = vmatmul.mubr.bf16.gmra.mrb[0].mxu0 %v366
    %v472 = vpop.f32.mrb[0].mxu0
    %v473 = vadd.f32 %v388, %v472
    %v474 = vpop.f32.mrb[0].mxu0
    %v475 = vpop.f32.mrb[0].mxu0
    %v476 = vadd.f32 %v388, %v475
    %v477 = vpop.f32.mrb[0].mxu0
    %478 = vdwg.mxu0
    %v479 = vmax.f32 %v473, 0.0
    %v480 = vmax.f32 %v476, 0.0
    %481 = vst [vmem:[#allocation7] sm:$0xff] %v479
    %482 = vst [vmem:[#allocation7 + $0x8] sm:$0xff] %v480
    // Predicated region
    $region38: #{tpu_custom_call.1} parent=1 // pred_check
      _
    $region39: #{tpu_custom_call.1} parent=1 // pred_check_branch
      %484 = sbr.rel (0) target = $region41
    $region40: #{tpu_custom_call.1} parent=1 // pred_region
      %s486 = ssub.s32 256, 256
      %487 = vsyncadd [#allocation4], %s486
      %s488 = sshll.u32 [#allocation7], 4
      %s489 = int_to_ptr.vmem [resolvable:$true] %s488
      %494 = dma.vmem_to_hbm [thread:$0]  %s489, 256, %s7, [#allocation4], 128, 128, 8
    $region41: #{tpu_custom_call.1} parent=1 // pred_fallthru
      _
    // Predicated region
    $region42: #{tpu_custom_call.1} parent=1 // pred_check
      _
    $region43: #{tpu_custom_call.1} parent=1 // pred_check_branch
      %496 = sbr.rel (0) target = $region45
    $region44: #{tpu_custom_call.1} parent=1 // pred_region
      %497 = dma.done [#allocation4], 256
    $region45: #{tpu_custom_call.1} parent=1 // pred_fallthru
      _
    %498 = vsyncpa [#allocation3], 1
    %499 = vsyncpa [#allocation6], 1
    %500 = vsyncpa [#allocation4], 1

</llo_original>
